<compile_context>
chip_gen: v6e
topology: v6e:2x2x1
jax: 0.10.0
libtpu: 0.0.40
codegen_flags: <defaults>
</compile_context>

<pallas_src>
import numpy as np
import jax
import jax.numpy as jnp
from jax.experimental import pallas as pl
from jax.experimental.pallas import tpu as pltpu


def _round_up(x, m):
    return (x + m - 1) // m * m


# ---------------------------------------------------------------- stage 1 --
def project_kernel(x_ref, w_ref, wa_ref, h_ref, f_ref):
    """h = x @ W (bf16 MXU, f32 acc); f[:,0] = x@(W a1), f[:,1] = x@(W a2)."""
    x = x_ref[...]                                          # (TM, Fin_pad) f32
    h = jnp.dot(x.astype(jnp.bfloat16), w_ref[...],         # W already bf16
                preferred_element_type=jnp.float32)         # (TM, Fout_pad)
    h_ref[...] = h.astype(jnp.bfloat16)
    # Attention-score halves via the algebraic fold f = x @ (W @ a), kept in
    # f32 so the softmax logits match the reference to f32 precision.
    f1 = jnp.sum(x * wa_ref[0:1, :], axis=1, keepdims=True)   # (TM, 1)
    f2 = jnp.sum(x * wa_ref[1:2, :], axis=1, keepdims=True)   # (TM, 1)
    # Pack both into one lane-dense (TM, 128) output block (unmasked stores).
    lane = jax.lax.broadcasted_iota(jnp.int32, f_ref.shape, dimension=1)
    f_ref[...] = jnp.where(lane == 0, f1, jnp.where(lane == 1, f2, 0.0))


# ---------------------------------------------------------------- stage 2 --
def _attention_body(f_ref, f2row_ref, adj_ref, h_ref, hp_ref, att_ref):
    f1 = f_ref[:, 0:1]                                      # (TM, 1)      f32
    e = f1 + f2row_ref[...]                                 # (TM, N_pad)  f32
    e = jnp.where(e > 0, e, 0.01 * e)                       # LeakyReLU(0.01)
    # Single select reused for both the row-max and the exp argument (cheaper
    # than a separate mask-multiply pass; stage 2 is VALU-slot bound).
    logits = jnp.where(adj_ref[...] > 0, e, jnp.float32(-9e15))
    logits = logits - jnp.max(logits, axis=1, keepdims=True)   # XLU reduce
    p = jnp.exp(logits)                                        # EUP
    # Exact reciprocal of the (TM, 1) row-sum: negligible cost, and the
    # returned attention rows sum to 1 at f32 precision.
    inv = 1.0 / jnp.sum(p, axis=1, keepdims=True)
    att = p * inv
    if att_ref is not None:
        att_ref[...] = att
    # TODO(synk): F.dropout(attention, p=0.0, training) is the identity here;
    # a training-mode dropout would use pltpu.prng_seed / prng_random_bits.
    hp = jnp.dot(att.astype(jnp.bfloat16), h_ref[...],      # bf16 MXU, f32 acc
                 preferred_element_type=jnp.float32)         # (TM, Fout_pad)
    hp_ref[...] = jnp.where(hp > 0, hp, jnp.exp(jnp.minimum(hp, 0.0)) - 1.0)


def attention_kernel_full(f_ref, f2row_ref, adj_ref, h_ref, hp_ref, att_ref):
    _attention_body(f_ref, f2row_ref, adj_ref, h_ref, hp_ref, att_ref)


def attention_kernel_noatt(f_ref, f2row_ref, adj_ref, h_ref, hp_ref):
    _attention_body(f_ref, f2row_ref, adj_ref, h_ref, hp_ref, None)


# ---------------------------------------------------------- VMEM budgeting --
def _vmem_limit_bytes():
    """Per-generation scoped-VMEM request (leaves headroom below physical)."""
    try:
        cap = pltpu.get_tpu_info().vmem_capacity_bytes
    except Exception:
        cap = 64 * 2**20            # unknown -> assume the smallest (v7x-like)
    if cap >= 100 * 2**20:          # v5e / v6e: 128 MiB physical per core
        return 104 * 2**20
    return 52 * 2**20               # v7x: 64 MiB physical per core


def _stage2_vmem_bytes(tm, n_pad, fout_pad, with_att):
    """Conservative per-step stage-2 footprint.  Resident (constant-index)
    blocks are counted twice on purpose: default pipelining still allocates
    two buffers for them."""
    dbl = 2
    b = dbl * (tm * 128 * 4 + tm * n_pad * 1)           # f tile + int8 adj tile
    b += dbl * (n_pad * fout_pad * 2 + 8 * n_pad * 4)   # resident h (bf16) + f2 row
    b += dbl * tm * fout_pad * 4                        # h_prime output tile
    if with_att:
        b += dbl * tm * n_pad * 4                       # attention output tile
    b += 3 * tm * n_pad * 4                             # e / logits / p temps
    return b


def _pick_block_rows(n_pad0, fout_pad, budget, with_att):
    for tm in (1024, 512, 256, 128):
        if tm <= n_pad0 and n_pad0 % tm == 0 and \
                _stage2_vmem_bytes(tm, n_pad0, fout_pad, with_att) <= budget:
            return tm
    # TODO(synk): for graphs so large that even TM=128 blows the budget
    # (N ~ 16K+ on v7x), stage 2 needs a second column-tile grid axis with
    # flash-style online softmax; not implemented here.
    return 128


# ------------------------------------------------------------------ wrapper -
def gat_layer(x, adj, W, a1, a2, *, block_rows=None, return_attention=True):
    N, Fin = x.shape
    Fout = W.shape[1]
    f32 = jnp.float32

    N_pad0 = _round_up(max(N, 1), 128)
    Fin_pad = _round_up(Fin, 128)
    Fout_pad = _round_up(Fout, 128)

    vmem_limit = _vmem_limit_bytes()
    if block_rows is None:
        TM = _pick_block_rows(N_pad0, Fout_pad, int(0.85 * vmem_limit),
                              return_attention)
    else:
        TM = block_rows
    N_pad = _round_up(N_pad0, TM)

    # Zero-padded, lane-dense operands.
    x_p = jnp.zeros((N_pad, Fin_pad), f32).at[:N, :Fin].set(x.astype(f32))
    # W ships as bf16 (cast once here, not per grid step inside the kernel).
    W_p = jnp.zeros((Fin_pad, Fout_pad), jnp.bfloat16).at[:Fin, :Fout].set(
        W.astype(jnp.bfloat16))
    # Fold the attention vectors through W once (tiny matmuls); one (2, Fin) array.
    wa = jnp.zeros((2, Fin_pad), f32)
    wa = wa.at[0, :Fin].set((W.astype(f32) @ a1.astype(f32))[:, 0])
    wa = wa.at[1, :Fin].set((W.astype(f32) @ a2.astype(f32))[:, 0])
    # adj only feeds a >0 compare -> ship as int8 (4x less DMA than f32).
    adj_p = jnp.zeros((N_pad, N_pad), jnp.int8).at[:N, :N].set(
        (adj > 0).astype(jnp.int8))

    grid = (N_pad // TM,)
    cparams = pltpu.CompilerParams(dimension_semantics=("parallel",),
                                   vmem_limit_bytes=vmem_limit)

    # ---- stage 1: projection + folded attention scores ----------------------
    h_bf16, f_scores = pl.pallas_call(
        project_kernel,
        grid=grid,
        in_specs=[
            pl.BlockSpec((TM, Fin_pad), lambda i: (i, 0)),
            pl.BlockSpec((Fin_pad, Fout_pad), lambda i: (0, 0)),   # resident W
            pl.BlockSpec((2, Fin_pad), lambda i: (0, 0)),          # resident wa
        ],
        out_specs=(
            pl.BlockSpec((TM, Fout_pad), lambda i: (i, 0)),
            pl.BlockSpec((TM, 128), lambda i: (i, 0)),             # lane-dense f
        ),
        out_shape=(
            jax.ShapeDtypeStruct((N_pad, Fout_pad), jnp.bfloat16),
            jax.ShapeDtypeStruct((N_pad, 128), f32),
        ),
        compiler_params=cparams,
    )(x_p, W_p, wa)

    # One global sublane->lane relayout of f2 (outside the per-tile hot path).
    f2_row = f_scores[:, 1].reshape(1, N_pad)

    # ---- stage 2: masked softmax + aggregation, tiled over node rows --------
    in_specs = [
        pl.BlockSpec((TM, 128), lambda i: (i, 0)),                 # f tile
        pl.BlockSpec((1, N_pad), lambda i: (0, 0)),                # resident f2
        pl.BlockSpec((TM, N_pad), lambda i: (i, 0)),               # adj tile
        pl.BlockSpec((N_pad, Fout_pad), lambda i: (0, 0)),         # resident h
    ]
    # NOTE: resident blocks (constant index_map) still get the default double
    # buffer; the stage-2 VMEM budget above counts them twice on purpose.
    hp_spec = pl.BlockSpec((TM, Fout_pad), lambda i: (i, 0))
    hp_shape = jax.ShapeDtypeStruct((N_pad, Fout_pad), f32)

    if return_attention:
        h_prime_p, att_p = pl.pallas_call(
            attention_kernel_full,
            grid=grid,
            in_specs=in_specs,
            out_specs=(hp_spec, pl.BlockSpec((TM, N_pad), lambda i: (i, 0))),
            out_shape=(hp_shape, jax.ShapeDtypeStruct((N_pad, N_pad), f32)),
            compiler_params=cparams,
        )(f_scores, f2_row, adj_p, h_bf16)
        return h_prime_p[:N, :Fout], att_p[:N, :N]

    h_prime_p = pl.pallas_call(
        attention_kernel_noatt,
        grid=grid,
        in_specs=in_specs,
        out_specs=hp_spec,
        out_shape=hp_shape,
        compiler_params=cparams,
    )(f_scores, f2_row, adj_p, h_bf16)
    return h_prime_p[:N, :Fout], None


# ---------------------------------------------------------------- reference -
def xavier_normal(key, shape, gain):
    fan_in, fan_out = shape[0], shape[1]
    std = gain * np.sqrt(2.0 / (fan_in + fan_out))
    return std * jax.random.normal(key, shape, dtype=jnp.float32)


def gat_reference(x, adj, W, a1, a2):
    h = x @ W
    e = (h @ a1) + (h @ a2).T
    e = jnp.where(e > 0, e, 0.01 * e)
    att = jnp.where(adj > 0, e, -9e15)
    att = jax.nn.softmax(att, axis=1)
    hp = att @ h
    return jax.nn.elu(hp), att


if __name__ == "__main__":
    N, Fin, Fout = 200, 16, 32
    key = jax.random.PRNGKey(0)
    k_x, k_adj, k_w, k_a1, k_a2 = jax.random.split(key, 5)

    x = jax.random.normal(k_x, (N, Fin), dtype=jnp.float32)
    # random sparse-ish adjacency with self loops
    adj = (jax.random.uniform(k_adj, (N, N)) > 0.7).astype(jnp.float32)
    adj = jnp.maximum(adj, jnp.eye(N, dtype=jnp.float32))

    gain = np.sqrt(2.0)
    W = xavier_normal(k_w, (Fin, Fout), gain)
    a1 = xavier_normal(k_a1, (Fout, 1), gain)
    a2 = xavier_normal(k_a2, (Fout, 1), gain)

    hp_ref, att_ref = gat_reference(x, adj, W, a1, a2)

    # 1) auto tile sizing (single grid step per stage at this toy size).
    h_prime, attention = gat_layer(x, adj, W, a1, a2)
    jax.block_until_ready((h_prime, attention))
    # logits and softmax are f32-exact (exact divide) -> tight attention check;
    # h / att@h use bf16 MXU operands (f32 acc) -> looser h_prime tolerance.
    np.testing.assert_allclose(np.asarray(attention), np.asarray(att_ref),
                               rtol=2e-3, atol=1e-6)
    np.testing.assert_allclose(np.asarray(h_prime), np.asarray(hp_ref),
                               rtol=3e-2, atol=3e-2)

    # 2) forced block_rows=128 exercises a multi-step (grid=(2,)) pipeline.
    h_prime2, attention2 = gat_layer(x, adj, W, a1, a2, block_rows=128)
    jax.block_until_ready((h_prime2, attention2))
    np.testing.assert_allclose(np.asarray(attention2), np.asarray(att_ref),
                               rtol=2e-3, atol=1e-6)
    np.testing.assert_allclose(np.asarray(h_prime2), np.asarray(hp_ref),
                               rtol=3e-2, atol=3e-2)

    # 3) attention-free fast path (skips the dominant N^2 f32 HBM write).
    h_prime3, att_none = gat_layer(x, adj, W, a1, a2, return_attention=False)
    jax.block_until_ready(h_prime3)
    assert att_none is None
    np.testing.assert_allclose(np.asarray(h_prime3), np.asarray(hp_ref),
                               rtol=3e-2, atol=3e-2)

    print("KERNEL_OK")
</pallas_src>

<mosaic_0001>
module attributes {stable_mosaic.version = 11 : i64} {
  func.func @project_kernel(%arg0: i32, %arg1: memref<256x128xf32, #tpu.memory_space<vmem>>, %arg2: memref<128x128xbf16, #tpu.memory_space<vmem>>, %arg3: memref<2x128xf32, #tpu.memory_space<vmem>>, %arg4: memref<256x128xbf16, #tpu.memory_space<vmem>>, %arg5: memref<256x128xf32, #tpu.memory_space<vmem>>) attributes {dimension_semantics = [#tpu.dimension_semantics<parallel>], iteration_bounds = array<i64: 1>, scalar_prefetch = 0 : i64, scratch_operands = 0 : i64, tpu.core_type = #tpu.core_type<tc>, window_params = [{transform_indices = @transform_0, window_bounds = array<i64: 256, 128>}, {pipeline_mode = #tpu.pipeline_mode<synchronous>, transform_indices = @transform_1, window_bounds = array<i64: 128, 128>}, {pipeline_mode = #tpu.pipeline_mode<synchronous>, transform_indices = @transform_2, window_bounds = array<i64: 2, 128>}, {transform_indices = @transform_3, window_bounds = array<i64: 256, 128>}, {transform_indices = @transform_4, window_bounds = array<i64: 256, 128>}]} {
    %c0 = arith.constant 0 : index
    %c0_0 = arith.constant 0 : index
    %0 = vector.load %arg1[%c0, %c0_0] : memref<256x128xf32, #tpu.memory_space<vmem>>, vector<256x128xf32>
    %1 = arith.truncf %0 : vector<256x128xf32> to vector<256x128xbf16>
    %c0_1 = arith.constant 0 : index
    %c0_2 = arith.constant 0 : index
    %2 = vector.load %arg2[%c0_1, %c0_2] : memref<128x128xbf16, #tpu.memory_space<vmem>>, vector<128x128xbf16>
    %cst = arith.constant dense<0.000000e+00> : vector<256x128xf32>
    %3 = tpu.matmul %1, %2, %cst {dimension_numbers = #tpu.dot_dimension_numbers<[1], [0], [0], [1], [0, 0, 1, 1], [], []>} : vector<256x128xbf16>, vector<128x128xbf16>, vector<256x128xf32> -> vector<256x128xf32>
    %4 = arith.truncf %3 : vector<256x128xf32> to vector<256x128xbf16>
    %c0_3 = arith.constant 0 : index
    %c0_4 = arith.constant 0 : index
    %5 = vector.load %arg4[%c0_3, %c0_4] : memref<256x128xbf16, #tpu.memory_space<vmem>>, vector<256x128xbf16>
    tpu.vector_store %arg4[%c0_3, %c0_4], %4 {strides = array<i32>} : memref<256x128xbf16, #tpu.memory_space<vmem>>, vector<256x128xbf16>,
    %c0_5 = arith.constant 0 : index
    %c0_6 = arith.constant 0 : index
    %6 = vector.load %arg3[%c0_5, %c0_6] : memref<2x128xf32, #tpu.memory_space<vmem>>, vector<1x128xf32>
    %7 = vector.broadcast %6 : vector<1x128xf32> to vector<256x128xf32>
    %8 = arith.mulf %0, %7 : vector<256x128xf32>
    %cst_7 = arith.constant dense<0.000000e+00> : vector<256xf32>
    %9 = vector.multi_reduction <add>, %8, %cst_7 [1] : vector<256x128xf32> to vector<256xf32>
    %10 = vector.shape_cast %9 : vector<256xf32> to vector<256x1xf32>
    %c1 = arith.constant 1 : index
    %c0_8 = arith.constant 0 : index
    %11 = vector.load %arg3[%c1, %c0_8] : memref<2x128xf32, #tpu.memory_space<vmem>>, vector<1x128xf32>
    %12 = vector.broadcast %11 : vector<1x128xf32> to vector<256x128xf32>
    %13 = arith.mulf %0, %12 : vector<256x128xf32>
    %cst_9 = arith.constant dense<0.000000e+00> : vector<256xf32>
    %14 = vector.multi_reduction <add>, %13, %cst_9 [1] : vector<256x128xf32> to vector<256xf32>
    %15 = vector.shape_cast %14 : vector<256xf32> to vector<256x1xf32>
    %16 = tpu.iota {dimensions = array<i32: 1>} : vector<256x128xi32>
    %c0_i32 = arith.constant 0 : i32
    %17 = vector.broadcast %c0_i32 : i32 to vector<256x128xi32>
    %18 = arith.cmpi eq, %16, %17 : vector<256x128xi32>
    %c1_i32 = arith.constant 1 : i32
    %19 = vector.broadcast %c1_i32 : i32 to vector<256x128xi32>
    %20 = arith.cmpi eq, %16, %19 : vector<256x128xi32>
    %cst_10 = arith.constant 0.000000e+00 : f32
    %21 = vector.shape_cast %15 : vector<256x1xf32> to vector<256x1xf32>
    %22 = vector.broadcast %21 : vector<256x1xf32> to vector<256x128xf32>
    %23 = vector.broadcast %cst_10 : f32 to vector<256x128xf32>
    %24 = arith.select %20, %22, %23 : vector<256x128xi1>, vector<256x128xf32>
    %25 = vector.shape_cast %10 : vector<256x1xf32> to vector<256x1xf32>
    %26 = vector.broadcast %25 : vector<256x1xf32> to vector<256x128xf32>
    %27 = arith.select %18, %26, %24 : vector<256x128xi1>, vector<256x128xf32>
    %c0_11 = arith.constant 0 : index
    %c0_12 = arith.constant 0 : index
    %28 = vector.load %arg5[%c0_11, %c0_12] : memref<256x128xf32, #tpu.memory_space<vmem>>, vector<256x128xf32>
    tpu.vector_store %arg5[%c0_11, %c0_12], %27 {strides = array<i32>} : memref<256x128xf32, #tpu.memory_space<vmem>>, vector<256x128xf32>,
    return
  }
  func.func @transform_0(%arg0: i32) -> (i32, i32) {
    %c0_i32 = arith.constant 0 : i32
    %c0_i32_0 = arith.constant 0 : i32
    return %arg0, %c0_i32 : i32, i32
  }
  func.func @transform_1(%arg0: i32) -> (i32, i32) {
    %c0_i32 = arith.constant 0 : i32
    %c0_i32_0 = arith.constant 0 : i32
    %c0_i32_1 = arith.constant 0 : i32
    return %c0_i32, %c0_i32_0 : i32, i32
  }
  func.func @transform_2(%arg0: i32) -> (i32, i32) {
    %c0_i32 = arith.constant 0 : i32
    %c0_i32_0 = arith.constant 0 : i32
    %c0_i32_1 = arith.constant 0 : i32
    return %c0_i32, %c0_i32_0 : i32, i32
  }
  func.func @transform_3(%arg0: i32) -> (i32, i32) {
    %c0_i32 = arith.constant 0 : i32
    %c0_i32_0 = arith.constant 0 : i32
    return %arg0, %c0_i32 : i32, i32
  }
  func.func @transform_4(%arg0: i32) -> (i32, i32) {
    %c0_i32 = arith.constant 0 : i32
    %c0_i32_0 = arith.constant 0 : i32
    return %arg0, %c0_i32 : i32, i32
  }
}

</mosaic_0001>

<llo_original>
// kernel: tpu_custom_call.1
$region0: #{tpu_custom_call.1}
  #allocation0 [shape = 'u32[]', space=smem, size = 0x4, offset = 0x4, fixed_abs, tag = 'smem constant byte address 0x4 - core index']
  #allocation1 [shape = 'u32[144,128]{1,0:T(1,128)}', space=vmem, size = 0x12000, scoped, tag = 'internal scratch']
  %s0 = inlined_call_operand.hbm [shape: f32[256,128], index: 0, kind: input, shape index: {}]
  %s1 = inlined_call_operand.hbm [shape: bf16[128,128], index: 1, kind: input, shape index: {}]
  %s2 = inlined_call_operand.vmem [shape: f32[2,128], index: 2, kind: input, shape index: {}]
  %s3 = inlined_call_operand.hbm [shape: bf16[256,128], index: 3, kind: output, shape index: {0}]
  %s4 = inlined_call_operand.hbm [shape: f32[256,128], index: 4, kind: output, shape index: {1}]
  %5 = xla_tuple %s3, %s4
  %s6 = sld [smem:[#allocation0]]
  $region38: #{tpu_custom_call.1} parent=0
    _
  %s8 = ssub.s32 1, %s6
  %s9 = scalar_select 0, %s8, %s6
  $region1: #{tpu_custom_call.1} parent=0
    #allocation2 [shape = 'u8[131072]{0}', space=vmem, size = 0x20000, scoped, tag = 'input window, operand 0, single buffered']
    #allocation3 [shape = 's32[1]{0}', space=sflag, size = 0x4, scoped, tag = 'scoped memory for tpu_custom_call.1']
    #allocation4 [shape = 's32[1]{0}', space=sflag, size = 0x4, scoped, tag = 'scoped memory for tpu_custom_call.1']
    #allocation5 [shape = 'u8[32768]{0}', space=vmem, size = 0x8000, scoped, tag = 'input window, operand 1, single buffered']
    #allocation6 [shape = 's32[1]{0}', space=sflag, size = 0x4, scoped, tag = 'scoped memory for tpu_custom_call.1']
    #allocation7 [shape = 'u8[65536]{0}', space=vmem, size = 0x10000, scoped, tag = 'output window, operand 0, single buffered']
    #allocation8 [shape = 'u8[131072]{0}', space=vmem, size = 0x20000, scoped, tag = 'output window, operand 1, single buffered']
    #allocation9 [shape = 's32[1]{0}', space=sflag, size = 0x4, scoped, tag = 'scoped memory for tpu_custom_call.1']
    %10 = vsyncpa [#allocation3], 0
    %11 = vsyncpa [#allocation6], 0
    %12 = vsyncpa [#allocation4], 0
    %13 = vsyncpa [#allocation9], 0
    // Predicated region
    $region2: #{tpu_custom_call.1} parent=1 // pred_check
      _
    $region3: #{tpu_custom_call.1} parent=1 // pred_check_branch
      %15 = sbr.rel (0) target = $region5
    $region4: #{tpu_custom_call.1} parent=1 // pred_region
      %s17 = ssub.s32 4096, 4096
      %18 = vsyncadd [#allocation3], %s17
      %s19 = sshll.u32 [#allocation2], 4
      %s20 = int_to_ptr.vmem [resolvable:$true] %s19
      %25 = dma.hbm_to_vmem [thread:$0]  %s0, 4096, %s20, [#allocation3], 128, 128, 8
    $region5: #{tpu_custom_call.1} parent=1 // pred_fallthru
      _
    // Predicated region
    $region6: #{tpu_custom_call.1} parent=1 // pred_check
      _
    $region7: #{tpu_custom_call.1} parent=1 // pred_check_branch
      %27 = sbr.rel (0) target = $region9
    $region8: #{tpu_custom_call.1} parent=1 // pred_region
      %s29 = ssub.s32 1024, 1024
      %30 = vsyncadd [#allocation6], %s29
      %s31 = sshll.u32 [#allocation5], 4
      %s32 = int_to_ptr.vmem [resolvable:$true] %s31
      %37 = dma.hbm_to_vmem [thread:$0]  %s1, 1024, %s32, [#allocation6], 64, 64, 4
    $region9: #{tpu_custom_call.1} parent=1 // pred_fallthru
      _
    // Predicated region
    $region10: #{tpu_custom_call.1} parent=1 // pred_check
      _
    $region11: #{tpu_custom_call.1} parent=1 // pred_check_branch
      %39 = sbr.rel (0) target = $region13
    $region12: #{tpu_custom_call.1} parent=1 // pred_region
      _
    $region13: #{tpu_custom_call.1} parent=1 // pred_fallthru
      _
    // Predicated region
    $region14: #{tpu_custom_call.1} parent=1 // pred_check
      _
    $region15: #{tpu_custom_call.1} parent=1 // pred_check_branch
      %41 = sbr.rel (0) target = $region17
    $region16: #{tpu_custom_call.1} parent=1 // pred_region
      %42 = dma.done [#allocation3], 4096
    $region17: #{tpu_custom_call.1} parent=1 // pred_fallthru
      _
    // Predicated region
    $region18: #{tpu_custom_call.1} parent=1 // pred_check
      _
    $region19: #{tpu_custom_call.1} parent=1 // pred_check_branch
      %44 = sbr.rel (0) target = $region21
    $region20: #{tpu_custom_call.1} parent=1 // pred_region
      %45 = dma.done [#allocation6], 1024
    $region21: #{tpu_custom_call.1} parent=1 // pred_fallthru
      _
    %v47 = vld [vmem:[#allocation2] sm:$0xff]
    %v48 = vld [vmem:[#allocation2 + $0x8] sm:$0xff]
    %v49 = vld [vmem:[#allocation2 + $0x10] sm:$0xff]
    %v50 = vld [vmem:[#allocation2 + $0x18] sm:$0xff]
    %v51 = vld [vmem:[#allocation2 + $0x20] sm:$0xff]
    %v52 = vld [vmem:[#allocation2 + $0x28] sm:$0xff]
    %v53 = vld [vmem:[#allocation2 + $0x30] sm:$0xff]
    %v54 = vld [vmem:[#allocation2 + $0x38] sm:$0xff]
    %v55 = vld [vmem:[#allocation2 + $0x40] sm:$0xff]
    %v56 = vld [vmem:[#allocation2 + $0x48] sm:$0xff]
    %v57 = vld [vmem:[#allocation2 + $0x50] sm:$0xff]
    %v58 = vld [vmem:[#allocation2 + $0x58] sm:$0xff]
    %v59 = vld [vmem:[#allocation2 + $0x60] sm:$0xff]
    %v60 = vld [vmem:[#allocation2 + $0x68] sm:$0xff]
    %v61 = vld [vmem:[#allocation2 + $0x70] sm:$0xff]
    %v62 = vld [vmem:[#allocation2 + $0x78] sm:$0xff]
    %v63 = vld [vmem:[#allocation2 + $0x80] sm:$0xff]
    %v64 = vld [vmem:[#allocation2 + $0x88] sm:$0xff]
    %v65 = vld [vmem:[#allocation2 + $0x90] sm:$0xff]
    %v66 = vld [vmem:[#allocation2 + $0x98] sm:$0xff]
    %v67 = vld [vmem:[#allocation2 + $0xa0] sm:$0xff]
    %v68 = vld [vmem:[#allocation2 + $0xa8] sm:$0xff]
    %v69 = vld [vmem:[#allocation2 + $0xb0] sm:$0xff]
    %v70 = vld [vmem:[#allocation2 + $0xb8] sm:$0xff]
    %v71 = vld [vmem:[#allocation2 + $0xc0] sm:$0xff]
    %v72 = vld [vmem:[#allocation2 + $0xc8] sm:$0xff]
    %v73 = vld [vmem:[#allocation2 + $0xd0] sm:$0xff]
    %v74 = vld [vmem:[#allocation2 + $0xd8] sm:$0xff]
    %v75 = vld [vmem:[#allocation2 + $0xe0] sm:$0xff]
    %v76 = vld [vmem:[#allocation2 + $0xe8] sm:$0xff]
    %v77 = vld [vmem:[#allocation2 + $0xf0] sm:$0xff]
    %v78 = vld [vmem:[#allocation2 + $0xf8] sm:$0xff]
    %v79 = vpack.c.bf16 %v48, %v47
    %v80 = vpack.c.bf16 %v50, %v49
    %v81 = vpack.c.bf16 %v52, %v51
    %v82 = vpack.c.bf16 %v54, %v53
    %v83 = vpack.c.bf16 %v56, %v55
    %v84 = vpack.c.bf16 %v58, %v57
    %v85 = vpack.c.bf16 %v60, %v59
    %v86 = vpack.c.bf16 %v62, %v61
    %v87 = vpack.c.bf16 %v64, %v63
    %v88 = vpack.c.bf16 %v66, %v65
    %v89 = vpack.c.bf16 %v68, %v67
    %v90 = vpack.c.bf16 %v70, %v69
    %v91 = vpack.c.bf16 %v72, %v71
    %v92 = vpack.c.bf16 %v74, %v73
    %v93 = vpack.c.bf16 %v76, %v75
    %v94 = vpack.c.bf16 %v78, %v77
    %v95 = vld [vmem:[#allocation5] sm:$0xf]
    %v96 = vld [vmem:[#allocation5 + $0x4] sm:$0xf]
    %v97 = vld [vmem:[#allocation5 + $0x8] sm:$0xf]
    %v98 = vld [vmem:[#allocation5 + $0xc] sm:$0xf]
    %v99 = vld [vmem:[#allocation5 + $0x10] sm:$0xf]
    %v100 = vld [vmem:[#allocation5 + $0x14] sm:$0xf]
    %v101 = vld [vmem:[#allocation5 + $0x18] sm:$0xf]
    %v102 = vld [vmem:[#allocation5 + $0x1c] sm:$0xf]
    %v103 = vld [vmem:[#allocation5 + $0x20] sm:$0xf]
    %v104 = vld [vmem:[#allocation5 + $0x24] sm:$0xf]
    %v105 = vld [vmem:[#allocation5 + $0x28] sm:$0xf]
    %v106 = vld [vmem:[#allocation5 + $0x2c] sm:$0xf]
    %v107 = vld [vmem:[#allocation5 + $0x30] sm:$0xf]
    %v108 = vld [vmem:[#allocation5 + $0x34] sm:$0xf]
    %v109 = vld [vmem:[#allocation5 + $0x38] sm:$0xf]
    %v110 = vld [vmem:[#allocation5 + $0x3c] sm:$0xf]
    %v127 = vunpack.c.l.b16 %v95
    %v128 = vunpack.c.l.b16 %v96
    %v129 = vunpack.c.l.b16 %v97
    %v130 = vunpack.c.l.b16 %v98
    %v131 = vunpack.c.l.b16 %v99
    %v132 = vunpack.c.l.b16 %v100
    %v133 = vunpack.c.l.b16 %v101
    %v134 = vunpack.c.l.b16 %v102
    %v135 = vunpack.c.l.b16 %v103
    %v136 = vunpack.c.l.b16 %v104
    %v137 = vunpack.c.l.b16 %v105
    %v138 = vunpack.c.l.b16 %v106
    %v139 = vunpack.c.l.b16 %v107
    %v140 = vunpack.c.l.b16 %v108
    %v141 = vunpack.c.l.b16 %v109
    %v142 = vunpack.c.l.b16 %v110
    %v143 = vpack.c.b16 %v128, %v127
    %v144 = vpack.c.b16 %v130, %v129
    %v145 = vpack.c.b16 %v132, %v131
    %v146 = vpack.c.b16 %v134, %v133
    %v147 = vpack.c.b16 %v136, %v135
    %v148 = vpack.c.b16 %v138, %v137
    %v149 = vpack.c.b16 %v140, %v139
    %v150 = vpack.c.b16 %v142, %v141
    %159 = vmatprep.subr.bf16.mxu0 0
    %160 = vmatpush1.bf16.msra.mxu0 %v150
    %161 = vmatprep.subr.bf16.mxu0 0
    %162 = vmatpush1.bf16.msra.mxu0 %v149
    %163 = vmatprep.subr.bf16.mxu0 0
    %164 = vmatpush1.bf16.msra.mxu0 %v148
    %165 = vmatprep.subr.bf16.mxu0 0
    %166 = vmatpush1.bf16.msra.mxu0 %v147
    %167 = vmatprep.subr.bf16.mxu0 0
    %168 = vmatpush1.bf16.msra.mxu0 %v146
    %169 = vmatprep.subr.bf16.mxu0 0
    %170 = vmatpush1.bf16.msra.mxu0 %v145
    %171 = vmatprep.subr.bf16.mxu0 0
    %172 = vmatpush1.bf16.msra.mxu0 %v144
    %173 = vmatprep.subr.bf16.mxu0 0
    %174 = vmatpush1.bf16.msra.mxu0 %v143
    %175 = vmatprep.subr.bf16.mxu0 0
    %176 = vmatpush2.bf16.msra.mxu0 0
    %177 = vmatprep.subr.bf16.mxu0 0
    %178 = vmatpush2.bf16.msra.mxu0 0
    %179 = vmatprep.subr.bf16.mxu0 0
    %180 = vmatpush2.bf16.msra.mxu0 0
    %181 = vmatprep.subr.bf16.mxu0 0
    %182 = vmatpush2.bf16.msra.mxu0 0
    %183 = vmatprep.subr.bf16.mxu0 0
    %184 = vmatpush2.bf16.msra.mxu0 0
    %185 = vmatprep.subr.bf16.mxu0 0
    %186 = vmatpush2.bf16.msra.mxu0 0
    %187 = vmatprep.subr.bf16.mxu0 0
    %188 = vmatpush2.bf16.msra.mxu0 0
    %189 = vmatprep.subr.bf16.mxu0 0
    %190 = vmatpush2.bf16.msra.mxu0 0
    %191 = vmatprep.mubr.bf16.mxu0 0
    %192 = vmatmul.mubr.bf16.gmra.mxu0 %v79
    %v193 = vpop.f32.mrf.mxu0
    %v194 = vadd.f32 0.0, %v193
    %v195 = vpop.f32.mrf.mxu0
    %v196 = vpop.f32.mrf.mxu0
    %v197 = vadd.f32 0.0, %v196
    %v198 = vpop.f32.mrf.mxu0
    %199 = vmatprep.mubr.bf16.mxu0 0
    %200 = vmatmul.mubr.bf16.gmra.mxu0 %v80
    %v201 = vpop.f32.mrf.mxu0
    %v202 = vadd.f32 0.0, %v201
    %v203 = vpop.f32.mrf.mxu0
    %v204 = vpop.f32.mrf.mxu0
    %v205 = vadd.f32 0.0, %v204
    %v206 = vpop.f32.mrf.mxu0
    %207 = vmatprep.mubr.bf16.mxu0 0
    %208 = vmatmul.mubr.bf16.gmra.mxu0 %v81
    %v209 = vpop.f32.mrf.mxu0
    %v210 = vadd.f32 0.0, %v209
    %v211 = vpop.f32.mrf.mxu0
    %v212 = vpop.f32.mrf.mxu0
    %v213 = vadd.f32 0.0, %v212
    %v214 = vpop.f32.mrf.mxu0
    %215 = vmatprep.mubr.bf16.mxu0 0
    %216 = vmatmul.mubr.bf16.gmra.mxu0 %v82
    %v217 = vpop.f32.mrf.mxu0
    %v218 = vadd.f32 0.0, %v217
    %v219 = vpop.f32.mrf.mxu0
    %v220 = vpop.f32.mrf.mxu0
    %v221 = vadd.f32 0.0, %v220
    %v222 = vpop.f32.mrf.mxu0
    %223 = vmatprep.mubr.bf16.mxu0 0
    %224 = vmatmul.mubr.bf16.gmra.mxu0 %v83
    %v225 = vpop.f32.mrf.mxu0
    %v226 = vadd.f32 0.0, %v225
    %v227 = vpop.f32.mrf.mxu0
    %v228 = vpop.f32.mrf.mxu0
    %v229 = vadd.f32 0.0, %v228
    %v230 = vpop.f32.mrf.mxu0
    %231 = vmatprep.mubr.bf16.mxu0 0
    %232 = vmatmul.mubr.bf16.gmra.mxu0 %v84
    %v233 = vpop.f32.mrf.mxu0
    %v234 = vadd.f32 0.0, %v233
    %v235 = vpop.f32.mrf.mxu0
    %v236 = vpop.f32.mrf.mxu0
    %v237 = vadd.f32 0.0, %v236
    %v238 = vpop.f32.mrf.mxu0
    %239 = vmatprep.mubr.bf16.mxu0 0
    %240 = vmatmul.mubr.bf16.gmra.mxu0 %v85
    %v241 = vpop.f32.mrf.mxu0
    %v242 = vadd.f32 0.0, %v241
    %v243 = vpop.f32.mrf.mxu0
    %v244 = vpop.f32.mrf.mxu0
    %v245 = vadd.f32 0.0, %v244
    %v246 = vpop.f32.mrf.mxu0
    %247 = vmatprep.mubr.bf16.mxu0 0
    %248 = vmatmul.mubr.bf16.gmra.mxu0 %v86
    %v249 = vpop.f32.mrf.mxu0
    %v250 = vadd.f32 0.0, %v249
    %v251 = vpop.f32.mrf.mxu0
    %v252 = vpop.f32.mrf.mxu0
    %v253 = vadd.f32 0.0, %v252
    %v254 = vpop.f32.mrf.mxu0
    %255 = vmatprep.mubr.bf16.mxu0 0
    %256 = vmatmul.mubr.bf16.gmra.mxu0 %v87
    %v257 = vpop.f32.mrf.mxu0
    %v258 = vadd.f32 0.0, %v257
    %v259 = vpop.f32.mrf.mxu0
    %v260 = vpop.f32.mrf.mxu0
    %v261 = vadd.f32 0.0, %v260
    %v262 = vpop.f32.mrf.mxu0
    %263 = vmatprep.mubr.bf16.mxu0 0
    %264 = vmatmul.mubr.bf16.gmra.mxu0 %v88
    %v265 = vpop.f32.mrf.mxu0
    %v266 = vadd.f32 0.0, %v265
    %v267 = vpop.f32.mrf.mxu0
    %v268 = vpop.f32.mrf.mxu0
    %v269 = vadd.f32 0.0, %v268
    %v270 = vpop.f32.mrf.mxu0
    %271 = vmatprep.mubr.bf16.mxu0 0
    %272 = vmatmul.mubr.bf16.gmra.mxu0 %v89
    %v273 = vpop.f32.mrf.mxu0
    %v274 = vadd.f32 0.0, %v273
    %v275 = vpop.f32.mrf.mxu0
    %v276 = vpop.f32.mrf.mxu0
    %v277 = vadd.f32 0.0, %v276
    %v278 = vpop.f32.mrf.mxu0
    %279 = vmatprep.mubr.bf16.mxu0 0
    %280 = vmatmul.mubr.bf16.gmra.mxu0 %v90
    %v281 = vpop.f32.mrf.mxu0
    %v282 = vadd.f32 0.0, %v281
    %v283 = vpop.f32.mrf.mxu0
    %v284 = vpop.f32.mrf.mxu0
    %v285 = vadd.f32 0.0, %v284
    %v286 = vpop.f32.mrf.mxu0
    %287 = vmatprep.mubr.bf16.mxu0 0
    %288 = vmatmul.mubr.bf16.gmra.mxu0 %v91
    %v289 = vpop.f32.mrf.mxu0
    %v290 = vadd.f32 0.0, %v289
    %v291 = vpop.f32.mrf.mxu0
    %v292 = vpop.f32.mrf.mxu0
    %v293 = vadd.f32 0.0, %v292
    %v294 = vpop.f32.mrf.mxu0
    %295 = vmatprep.mubr.bf16.mxu0 0
    %296 = vmatmul.mubr.bf16.gmra.mxu0 %v92
    %v297 = vpop.f32.mrf.mxu0
    %v298 = vadd.f32 0.0, %v297
    %v299 = vpop.f32.mrf.mxu0
    %v300 = vpop.f32.mrf.mxu0
    %v301 = vadd.f32 0.0, %v300
    %v302 = vpop.f32.mrf.mxu0
    %303 = vmatprep.mubr.bf16.mxu0 0
    %304 = vmatmul.mubr.bf16.gmra.mxu0 %v93
    %v305 = vpop.f32.mrf.mxu0
    %v306 = vadd.f32 0.0, %v305
    %v307 = vpop.f32.mrf.mxu0
    %v308 = vpop.f32.mrf.mxu0
    %v309 = vadd.f32 0.0, %v308
    %v310 = vpop.f32.mrf.mxu0
    %311 = vmatprep.mubr.bf16.mxu0 0
    %312 = vmatmul.mubr.bf16.gmra.mxu0 %v94
    %v313 = vpop.f32.mrf.mxu0
    %v314 = vadd.f32 0.0, %v313
    %v315 = vpop.f32.mrf.mxu0
    %v316 = vpop.f32.mrf.mxu0
    %v317 = vadd.f32 0.0, %v316
    %v318 = vpop.f32.mrf.mxu0
    %319 = vdwg.mxu0
    %v320 = vpack.c.bf16 %v197, %v194
    %v321 = vpack.c.bf16 %v205, %v202
    %v322 = vpack.c.bf16 %v213, %v210
    %v323 = vpack.c.bf16 %v221, %v218
    %v324 = vpack.c.bf16 %v229, %v226
    %v325 = vpack.c.bf16 %v237, %v234
    %v326 = vpack.c.bf16 %v245, %v242
    %v327 = vpack.c.bf16 %v253, %v250
    %v328 = vpack.c.bf16 %v261, %v258
    %v329 = vpack.c.bf16 %v269, %v266
    %v330 = vpack.c.bf16 %v277, %v274
    %v331 = vpack.c.bf16 %v285, %v282
    %v332 = vpack.c.bf16 %v293, %v290
    %v333 = vpack.c.bf16 %v301, %v298
    %v334 = vpack.c.bf16 %v309, %v306
    %v335 = vpack.c.bf16 %v317, %v314
    %v352 = vunpack.c.l.b16 %v320
    %v353 = vunpack.c.h.b16 %v320
    %v354 = vunpack.c.l.b16 %v321
    %v355 = vunpack.c.h.b16 %v321
    %v356 = vunpack.c.l.b16 %v322
    %v357 = vunpack.c.h.b16 %v322
    %v358 = vunpack.c.l.b16 %v323
    %v359 = vunpack.c.h.b16 %v323
    %v360 = vunpack.c.l.b16 %v324
    %v361 = vunpack.c.h.b16 %v324
    %v362 = vunpack.c.l.b16 %v325
    %v363 = vunpack.c.h.b16 %v325
    %v364 = vunpack.c.l.b16 %v326
    %v365 = vunpack.c.h.b16 %v326
    %v366 = vunpack.c.l.b16 %v327
    %v367 = vunpack.c.h.b16 %v327
    %v368 = vunpack.c.l.b16 %v328
    %v369 = vunpack.c.h.b16 %v328
    %v370 = vunpack.c.l.b16 %v329
    %v371 = vunpack.c.h.b16 %v329
    %v372 = vunpack.c.l.b16 %v330
    %v373 = vunpack.c.h.b16 %v330
    %v374 = vunpack.c.l.b16 %v331
    %v375 = vunpack.c.h.b16 %v331
    %v376 = vunpack.c.l.b16 %v332
    %v377 = vunpack.c.h.b16 %v332
    %v378 = vunpack.c.l.b16 %v333
    %v379 = vunpack.c.h.b16 %v333
    %v380 = vunpack.c.l.b16 %v334
    %v381 = vunpack.c.h.b16 %v334
    %v382 = vunpack.c.l.b16 %v335
    %v383 = vunpack.c.h.b16 %v335
    %v384 = vpack.c.b16 %v352, %v352
    %v385 = vpack.c.b16 %v353, %v353
    %v386 = vpack.c.b16 %v354, %v354
    %v387 = vpack.c.b16 %v355, %v355
    %v388 = vpack.c.b16 %v356, %v356
    %v389 = vpack.c.b16 %v357, %v357
    %v390 = vpack.c.b16 %v358, %v358
    %v391 = vpack.c.b16 %v359, %v359
    %v392 = vpack.c.b16 %v360, %v360
    %v393 = vpack.c.b16 %v361, %v361
    %v394 = vpack.c.b16 %v362, %v362
    %v395 = vpack.c.b16 %v363, %v363
    %v396 = vpack.c.b16 %v364, %v364
    %v397 = vpack.c.b16 %v365, %v365
    %v398 = vpack.c.b16 %v366, %v366
    %v399 = vpack.c.b16 %v367, %v367
    %v400 = vpack.c.b16 %v368, %v368
    %v401 = vpack.c.b16 %v369, %v369
    %v402 = vpack.c.b16 %v370, %v370
    %v403 = vpack.c.b16 %v371, %v371
    %v404 = vpack.c.b16 %v372, %v372
    %v405 = vpack.c.b16 %v373, %v373
    %v406 = vpack.c.b16 %v374, %v374
    %v407 = vpack.c.b16 %v375, %v375
    %v408 = vpack.c.b16 %v376, %v376
    %v409 = vpack.c.b16 %v377, %v377
    %v410 = vpack.c.b16 %v378, %v378
    %v411 = vpack.c.b16 %v379, %v379
    %v412 = vpack.c.b16 %v380, %v380
    %v413 = vpack.c.b16 %v381, %v381
    %v414 = vpack.c.b16 %v382, %v382
    %v415 = vpack.c.b16 %v383, %v383
    %448 = vst [vmem:[#allocation7] sm:$0xf] %v384
    %449 = vst [vmem:[#allocation7 + $0x4] sm:$0xf] %v385
    %450 = vst [vmem:[#allocation7 + $0x8] sm:$0xf] %v386
    %451 = vst [vmem:[#allocation7 + $0xc] sm:$0xf] %v387
    %452 = vst [vmem:[#allocation7 + $0x10] sm:$0xf] %v388
    %453 = vst [vmem:[#allocation7 + $0x14] sm:$0xf] %v389
    %454 = vst [vmem:[#allocation7 + $0x18] sm:$0xf] %v390
    %455 = vst [vmem:[#allocation7 + $0x1c] sm:$0xf] %v391
    %456 = vst [vmem:[#allocation7 + $0x20] sm:$0xf] %v392
    %457 = vst [vmem:[#allocation7 + $0x24] sm:$0xf] %v393
    %458 = vst [vmem:[#allocation7 + $0x28] sm:$0xf] %v394
    %459 = vst [vmem:[#allocation7 + $0x2c] sm:$0xf] %v395
    %460 = vst [vmem:[#allocation7 + $0x30] sm:$0xf] %v396
    %461 = vst [vmem:[#allocation7 + $0x34] sm:$0xf] %v397
    %462 = vst [vmem:[#allocation7 + $0x38] sm:$0xf] %v398
    %463 = vst [vmem:[#allocation7 + $0x3c] sm:$0xf] %v399
    %464 = vst [vmem:[#allocation7 + $0x40] sm:$0xf] %v400
    %465 = vst [vmem:[#allocation7 + $0x44] sm:$0xf] %v401
    %466 = vst [vmem:[#allocation7 + $0x48] sm:$0xf] %v402
    %467 = vst [vmem:[#allocation7 + $0x4c] sm:$0xf] %v403
    %468 = vst [vmem:[#allocation7 + $0x50] sm:$0xf] %v404
    %469 = vst [vmem:[#allocation7 + $0x54] sm:$0xf] %v405
    %470 = vst [vmem:[#allocation7 + $0x58] sm:$0xf] %v406
    %471 = vst [vmem:[#allocation7 + $0x5c] sm:$0xf] %v407
    %472 = vst [vmem:[#allocation7 + $0x60] sm:$0xf] %v408
    %473 = vst [vmem:[#allocation7 + $0x64] sm:$0xf] %v409
    %474 = vst [vmem:[#allocation7 + $0x68] sm:$0xf] %v410
    %475 = vst [vmem:[#allocation7 + $0x6c] sm:$0xf] %v411
    %476 = vst [vmem:[#allocation7 + $0x70] sm:$0xf] %v412
    %477 = vst [vmem:[#allocation7 + $0x74] sm:$0xf] %v413
    %478 = vst [vmem:[#allocation7 + $0x78] sm:$0xf] %v414
    %479 = vst [vmem:[#allocation7 + $0x7c] sm:$0xf] %v415
    %v480 = vld [vmem:[%s2] sm:$0x1]
    %v481 = vlaneseq
    %v482 = vshrl.u32 %v481, 7
    %v483 = vsub.s32 0, %v482
    %v484 = vrot.slane %v480, %v483
    %v485 = vmul.f32 %v47, %v484
    %v486 = vmul.f32 %v48, %v484
    %v487 = vmul.f32 %v49, %v484
    %v488 = vmul.f32 %v50, %v484
    %v489 = vmul.f32 %v51, %v484
    %v490 = vmul.f32 %v52, %v484
    %v491 = vmul.f32 %v53, %v484
    %v492 = vmul.f32 %v54, %v484
    %v493 = vmul.f32 %v55, %v484
    %v494 = vmul.f32 %v56, %v484
    %v495 = vmul.f32 %v57, %v484
    %v496 = vmul.f32 %v58, %v484
    %v497 = vmul.f32 %v59, %v484
    %v498 = vmul.f32 %v60, %v484
    %v499 = vmul.f32 %v61, %v484
    %v500 = vmul.f32 %v62, %v484
    %v501 = vmul.f32 %v63, %v484
    %v502 = vmul.f32 %v64, %v484
    %v503 = vmul.f32 %v65, %v484
    %v504 = vmul.f32 %v66, %v484
    %v505 = vmul.f32 %v67, %v484
    %v506 = vmul.f32 %v68, %v484
    %v507 = vmul.f32 %v69, %v484
    %v508 = vmul.f32 %v70, %v484
    %v509 = vmul.f32 %v71, %v484
    %v510 = vmul.f32 %v72, %v484
    %v511 = vmul.f32 %v73, %v484
    %v512 = vmul.f32 %v74, %v484
    %v513 = vmul.f32 %v75, %v484
    %v514 = vmul.f32 %v76, %v484
    %v515 = vmul.f32 %v77, %v484
    %v516 = vmul.f32 %v78, %v484
    %517 = vadd.xlane.f32.xlu0 %v485
    %v518 = vpop.xlane.xlu0 %517
    %519 = vadd.xlane.f32.xlu0 %v486
    %v520 = vpop.xlane.xlu0 %519
    %521 = vadd.xlane.f32.xlu0 %v487
    %v522 = vpop.xlane.xlu0 %521
    %523 = vadd.xlane.f32.xlu0 %v488
    %v524 = vpop.xlane.xlu0 %523
    %525 = vadd.xlane.f32.xlu0 %v489
    %v526 = vpop.xlane.xlu0 %525
    %527 = vadd.xlane.f32.xlu0 %v490
    %v528 = vpop.xlane.xlu0 %527
    %529 = vadd.xlane.f32.xlu0 %v491
    %v530 = vpop.xlane.xlu0 %529
    %531 = vadd.xlane.f32.xlu0 %v492
    %v532 = vpop.xlane.xlu0 %531
    %533 = vadd.xlane.f32.xlu0 %v493
    %v534 = vpop.xlane.xlu0 %533
    %535 = vadd.xlane.f32.xlu0 %v494
    %v536 = vpop.xlane.xlu0 %535
    %537 = vadd.xlane.f32.xlu0 %v495
    %v538 = vpop.xlane.xlu0 %537
    %539 = vadd.xlane.f32.xlu0 %v496
    %v540 = vpop.xlane.xlu0 %539
    %541 = vadd.xlane.f32.xlu0 %v497
    %v542 = vpop.xlane.xlu0 %541
    %543 = vadd.xlane.f32.xlu0 %v498
    %v544 = vpop.xlane.xlu0 %543
    %545 = vadd.xlane.f32.xlu0 %v499
    %v546 = vpop.xlane.xlu0 %545
    %547 = vadd.xlane.f32.xlu0 %v500
    %v548 = vpop.xlane.xlu0 %547
    %549 = vadd.xlane.f32.xlu0 %v501
    %v550 = vpop.xlane.xlu0 %549
    %551 = vadd.xlane.f32.xlu0 %v502
    %v552 = vpop.xlane.xlu0 %551
    %553 = vadd.xlane.f32.xlu0 %v503
    %v554 = vpop.xlane.xlu0 %553
    %555 = vadd.xlane.f32.xlu0 %v504
    %v556 = vpop.xlane.xlu0 %555
    %557 = vadd.xlane.f32.xlu0 %v505
    %v558 = vpop.xlane.xlu0 %557
    %559 = vadd.xlane.f32.xlu0 %v506
    %v560 = vpop.xlane.xlu0 %559
    %561 = vadd.xlane.f32.xlu0 %v507
    %v562 = vpop.xlane.xlu0 %561
    %563 = vadd.xlane.f32.xlu0 %v508
    %v564 = vpop.xlane.xlu0 %563
    %565 = vadd.xlane.f32.xlu0 %v509
    %v566 = vpop.xlane.xlu0 %565
    %567 = vadd.xlane.f32.xlu0 %v510
    %v568 = vpop.xlane.xlu0 %567
    %569 = vadd.xlane.f32.xlu0 %v511
    %v570 = vpop.xlane.xlu0 %569
    %571 = vadd.xlane.f32.xlu0 %v512
    %v572 = vpop.xlane.xlu0 %571
    %573 = vadd.xlane.f32.xlu0 %v513
    %v574 = vpop.xlane.xlu0 %573
    %575 = vadd.xlane.f32.xlu0 %v514
    %v576 = vpop.xlane.xlu0 %575
    %577 = vadd.xlane.f32.xlu0 %v515
    %v578 = vpop.xlane.xlu0 %577
    %579 = vadd.xlane.f32.xlu0 %v516
    %v580 = vpop.xlane.xlu0 %579
    %v581 = vld [vmem:[%s2 + $0x1] sm:$0x1]
    %v582 = vlaneseq
    %v583 = vshrl.u32 %v582, 7
    %v584 = vsub.s32 0, %v583
    %v585 = vrot.slane %v581, %v584
    %v586 = vmul.f32 %v47, %v585
    %v587 = vmul.f32 %v48, %v585
    %v588 = vmul.f32 %v49, %v585
    %v589 = vmul.f32 %v50, %v585
    %v590 = vmul.f32 %v51, %v585
    %v591 = vmul.f32 %v52, %v585
    %v592 = vmul.f32 %v53, %v585
    %v593 = vmul.f32 %v54, %v585
    %v594 = vmul.f32 %v55, %v585
    %v595 = vmul.f32 %v56, %v585
    %v596 = vmul.f32 %v57, %v585
    %v597 = vmul.f32 %v58, %v585
    %v598 = vmul.f32 %v59, %v585
    %v599 = vmul.f32 %v60, %v585
    %v600 = vmul.f32 %v61, %v585
    %v601 = vmul.f32 %v62, %v585
    %v602 = vmul.f32 %v63, %v585
    %v603 = vmul.f32 %v64, %v585
    %v604 = vmul.f32 %v65, %v585
    %v605 = vmul.f32 %v66, %v585
    %v606 = vmul.f32 %v67, %v585
    %v607 = vmul.f32 %v68, %v585
    %v608 = vmul.f32 %v69, %v585
    %v609 = vmul.f32 %v70, %v585
    %v610 = vmul.f32 %v71, %v585
    %v611 = vmul.f32 %v72, %v585
    %v612 = vmul.f32 %v73, %v585
    %v613 = vmul.f32 %v74, %v585
    %v614 = vmul.f32 %v75, %v585
    %v615 = vmul.f32 %v76, %v585
    %v616 = vmul.f32 %v77, %v585
    %v617 = vmul.f32 %v78, %v585
    %618 = vadd.xlane.f32.xlu0 %v586
    %v619 = vpop.xlane.xlu0 %618
    %620 = vadd.xlane.f32.xlu0 %v587
    %v621 = vpop.xlane.xlu0 %620
    %622 = vadd.xlane.f32.xlu0 %v588
    %v623 = vpop.xlane.xlu0 %622
    %624 = vadd.xlane.f32.xlu0 %v589
    %v625 = vpop.xlane.xlu0 %624
    %626 = vadd.xlane.f32.xlu0 %v590
    %v627 = vpop.xlane.xlu0 %626
    %628 = vadd.xlane.f32.xlu0 %v591
    %v629 = vpop.xlane.xlu0 %628
    %630 = vadd.xlane.f32.xlu0 %v592
    %v631 = vpop.xlane.xlu0 %630
    %632 = vadd.xlane.f32.xlu0 %v593
    %v633 = vpop.xlane.xlu0 %632
    %634 = vadd.xlane.f32.xlu0 %v594
    %v635 = vpop.xlane.xlu0 %634
    %636 = vadd.xlane.f32.xlu0 %v595
    %v637 = vpop.xlane.xlu0 %636
    %638 = vadd.xlane.f32.xlu0 %v596
    %v639 = vpop.xlane.xlu0 %638
    %640 = vadd.xlane.f32.xlu0 %v597
    %v641 = vpop.xlane.xlu0 %640
    %642 = vadd.xlane.f32.xlu0 %v598
    %v643 = vpop.xlane.xlu0 %642
    %644 = vadd.xlane.f32.xlu0 %v599
    %v645 = vpop.xlane.xlu0 %644
    %646 = vadd.xlane.f32.xlu0 %v600
    %v647 = vpop.xlane.xlu0 %646
    %648 = vadd.xlane.f32.xlu0 %v601
    %v649 = vpop.xlane.xlu0 %648
    %650 = vadd.xlane.f32.xlu0 %v602
    %v651 = vpop.xlane.xlu0 %650
    %652 = vadd.xlane.f32.xlu0 %v603
    %v653 = vpop.xlane.xlu0 %652
    %654 = vadd.xlane.f32.xlu0 %v604
    %v655 = vpop.xlane.xlu0 %654
    %656 = vadd.xlane.f32.xlu0 %v605
    %v657 = vpop.xlane.xlu0 %656
    %658 = vadd.xlane.f32.xlu0 %v606
    %v659 = vpop.xlane.xlu0 %658
    %660 = vadd.xlane.f32.xlu0 %v607
    %v661 = vpop.xlane.xlu0 %660
    %662 = vadd.xlane.f32.xlu0 %v608
    %v663 = vpop.xlane.xlu0 %662
    %664 = vadd.xlane.f32.xlu0 %v609
    %v665 = vpop.xlane.xlu0 %664
    %666 = vadd.xlane.f32.xlu0 %v610
    %v667 = vpop.xlane.xlu0 %666
    %668 = vadd.xlane.f32.xlu0 %v611
    %v669 = vpop.xlane.xlu0 %668
    %670 = vadd.xlane.f32.xlu0 %v612
    %v671 = vpop.xlane.xlu0 %670
    %672 = vadd.xlane.f32.xlu0 %v613
    %v673 = vpop.xlane.xlu0 %672
    %674 = vadd.xlane.f32.xlu0 %v614
    %v675 = vpop.xlane.xlu0 %674
    %676 = vadd.xlane.f32.xlu0 %v615
    %v677 = vpop.xlane.xlu0 %676
    %678 = vadd.xlane.f32.xlu0 %v616
    %v679 = vpop.xlane.xlu0 %678
    %680 = vadd.xlane.f32.xlu0 %v617
    %v681 = vpop.xlane.xlu0 %680
    %v682 = vlaneseq
    %v683 = vand.u32 %v682, 127
    %vm684 = vcmp.eq.s32.totalorder %v683, 0
    %vm685 = vcmp.eq.s32.totalorder %v683, 1
    %v686 = vsel %vm685, %v619, 0.0
    %v687 = vsel %vm685, %v621, 0.0
    %v688 = vsel %vm685, %v623, 0.0
    %v689 = vsel %vm685, %v625, 0.0
    %v690 = vsel %vm685, %v627, 0.0
    %v691 = vsel %vm685, %v629, 0.0
    %v692 = vsel %vm685, %v631, 0.0
    %v693 = vsel %vm685, %v633, 0.0
    %v694 = vsel %vm685, %v635, 0.0
    %v695 = vsel %vm685, %v637, 0.0
    %v696 = vsel %vm685, %v639, 0.0
    %v697 = vsel %vm685, %v641, 0.0
    %v698 = vsel %vm685, %v643, 0.0
    %v699 = vsel %vm685, %v645, 0.0
    %v700 = vsel %vm685, %v647, 0.0
    %v701 = vsel %vm685, %v649, 0.0
    %v702 = vsel %vm685, %v651, 0.0
    %v703 = vsel %vm685, %v653, 0.0
    %v704 = vsel %vm685, %v655, 0.0
    %v705 = vsel %vm685, %v657, 0.0
    %v706 = vsel %vm685, %v659, 0.0
    %v707 = vsel %vm685, %v661, 0.0
    %v708 = vsel %vm685, %v663, 0.0
    %v709 = vsel %vm685, %v665, 0.0
    %v710 = vsel %vm685, %v667, 0.0
    %v711 = vsel %vm685, %v669, 0.0
    %v712 = vsel %vm685, %v671, 0.0
    %v713 = vsel %vm685, %v673, 0.0
    %v714 = vsel %vm685, %v675, 0.0
    %v715 = vsel %vm685, %v677, 0.0
    %v716 = vsel %vm685, %v679, 0.0
    %v717 = vsel %vm685, %v681, 0.0
    %v718 = vsel %vm684, %v518, %v686
    %v719 = vsel %vm684, %v520, %v687
    %v720 = vsel %vm684, %v522, %v688
    %v721 = vsel %vm684, %v524, %v689
    %v722 = vsel %vm684, %v526, %v690
    %v723 = vsel %vm684, %v528, %v691
    %v724 = vsel %vm684, %v530, %v692
    %v725 = vsel %vm684, %v532, %v693
    %v726 = vsel %vm684, %v534, %v694
    %v727 = vsel %vm684, %v536, %v695
    %v728 = vsel %vm684, %v538, %v696
    %v729 = vsel %vm684, %v540, %v697
    %v730 = vsel %vm684, %v542, %v698
    %v731 = vsel %vm684, %v544, %v699
    %v732 = vsel %vm684, %v546, %v700
    %v733 = vsel %vm684, %v548, %v701
    %v734 = vsel %vm684, %v550, %v702
    %v735 = vsel %vm684, %v552, %v703
    %v736 = vsel %vm684, %v554, %v704
    %v737 = vsel %vm684, %v556, %v705
    %v738 = vsel %vm684, %v558, %v706
    %v739 = vsel %vm684, %v560, %v707
    %v740 = vsel %vm684, %v562, %v708
    %v741 = vsel %vm684, %v564, %v709
    %v742 = vsel %vm684, %v566, %v710
    %v743 = vsel %vm684, %v568, %v711
    %v744 = vsel %vm684, %v570, %v712
    %v745 = vsel %vm684, %v572, %v713
    %v746 = vsel %vm684, %v574, %v714
    %v747 = vsel %vm684, %v576, %v715
    %v748 = vsel %vm684, %v578, %v716
    %v749 = vsel %vm684, %v580, %v717
    %750 = vst [vmem:[#allocation8] sm:$0xff] %v718
    %751 = vst [vmem:[#allocation8 + $0x8] sm:$0xff] %v719
    %752 = vst [vmem:[#allocation8 + $0x10] sm:$0xff] %v720
    %753 = vst [vmem:[#allocation8 + $0x18] sm:$0xff] %v721
    %754 = vst [vmem:[#allocation8 + $0x20] sm:$0xff] %v722
    %755 = vst [vmem:[#allocation8 + $0x28] sm:$0xff] %v723
    %756 = vst [vmem:[#allocation8 + $0x30] sm:$0xff] %v724
    %757 = vst [vmem:[#allocation8 + $0x38] sm:$0xff] %v725
    %758 = vst [vmem:[#allocation8 + $0x40] sm:$0xff] %v726
    %759 = vst [vmem:[#allocation8 + $0x48] sm:$0xff] %v727
    %760 = vst [vmem:[#allocation8 + $0x50] sm:$0xff] %v728
    %761 = vst [vmem:[#allocation8 + $0x58] sm:$0xff] %v729
    %762 = vst [vmem:[#allocation8 + $0x60] sm:$0xff] %v730
    %763 = vst [vmem:[#allocation8 + $0x68] sm:$0xff] %v731
    %764 = vst [vmem:[#allocation8 + $0x70] sm:$0xff] %v732
    %765 = vst [vmem:[#allocation8 + $0x78] sm:$0xff] %v733
    %766 = vst [vmem:[#allocation8 + $0x80] sm:$0xff] %v734
    %767 = vst [vmem:[#allocation8 + $0x88] sm:$0xff] %v735
    %768 = vst [vmem:[#allocation8 + $0x90] sm:$0xff] %v736
    %769 = vst [vmem:[#allocation8 + $0x98] sm:$0xff] %v737
    %770 = vst [vmem:[#allocation8 + $0xa0] sm:$0xff] %v738
    %771 = vst [vmem:[#allocation8 + $0xa8] sm:$0xff] %v739
    %772 = vst [vmem:[#allocation8 + $0xb0] sm:$0xff] %v740
    %773 = vst [vmem:[#allocation8 + $0xb8] sm:$0xff] %v741
    %774 = vst [vmem:[#allocation8 + $0xc0] sm:$0xff] %v742
    %775 = vst [vmem:[#allocation8 + $0xc8] sm:$0xff] %v743
    %776 = vst [vmem:[#allocation8 + $0xd0] sm:$0xff] %v744
    %777 = vst [vmem:[#allocation8 + $0xd8] sm:$0xff] %v745
    %778 = vst [vmem:[#allocation8 + $0xe0] sm:$0xff] %v746
    %779 = vst [vmem:[#allocation8 + $0xe8] sm:$0xff] %v747
    %780 = vst [vmem:[#allocation8 + $0xf0] sm:$0xff] %v748
    %781 = vst [vmem:[#allocation8 + $0xf8] sm:$0xff] %v749
    // Predicated region
    $region22: #{tpu_custom_call.1} parent=1 // pred_check
      _
    $region23: #{tpu_custom_call.1} parent=1 // pred_check_branch
      %783 = sbr.rel (0) target = $region25
    $region24: #{tpu_custom_call.1} parent=1 // pred_region
      %s785 = ssub.s32 2048, 2048
      %786 = vsyncadd [#allocation4], %s785
      %s787 = sshll.u32 [#allocation7], 4
      %s788 = int_to_ptr.vmem [resolvable:$true] %s787
      %793 = dma.vmem_to_hbm [thread:$0]  %s788, 2048, %s3, [#allocation4], 64, 64, 4
    $region25: #{tpu_custom_call.1} parent=1 // pred_fallthru
      _
    // Predicated region
    $region26: #{tpu_custom_call.1} parent=1 // pred_check
      _
    $region27: #{tpu_custom_call.1} parent=1 // pred_check_branch
      %795 = sbr.rel (0) target = $region29
    $region28: #{tpu_custom_call.1} parent=1 // pred_region
      %s797 = ssub.s32 4096, 4096
      %798 = vsyncadd [#allocation9], %s797
      %s799 = sshll.u32 [#allocation8], 4
      %s800 = int_to_ptr.vmem [resolvable:$true] %s799
      %805 = dma.vmem_to_hbm [thread:$0]  %s800, 4096, %s4, [#allocation9], 128, 128, 8
    $region29: #{tpu_custom_call.1} parent=1 // pred_fallthru
      _
    // Predicated region
    $region30: #{tpu_custom_call.1} parent=1 // pred_check
      _
    $region31: #{tpu_custom_call.1} parent=1 // pred_check_branch
      %807 = sbr.rel (0) target = $region33
    $region32: #{tpu_custom_call.1} parent=1 // pred_region
      %808 = dma.done [#allocation4], 2048
    $region33: #{tpu_custom_call.1} parent=1 // pred_fallthru
      _
    // Predicated region
    $region34: #{tpu_custom_call.1} parent=1 // pred_check
      _
    $region35: #{tpu_custom_call.1} parent=1 // pred_check_branch
      %810 = sbr.rel (0) target = $region37
    $region36: #{tpu_custom_call.1} parent=1 // pred_region
      %811 = dma.done [#allocation9], 4096
    $region37: #{tpu_custom_call.1} parent=1 // pred_fallthru
      _
    %812 = vsyncpa [#allocation3], 1
    %813 = vsyncpa [#allocation6], 1
    %814 = vsyncpa [#allocation4], 1
    %815 = vsyncpa [#allocation9], 1

</llo_original>
